<compile_context>
chip_gen: v7x
topology: tpu7x:2x2x1
jax: 0.10.0
libtpu: 0.0.40
codegen_flags: <defaults>
</compile_context>

<pallas_src>
import jax
import jax.numpy as jnp
from jax.experimental import pallas as pl
from jax.experimental.pallas import tpu as pltpu


def _discriminator_kernel(xT_ref, w0_ref, b0_ref, w1_ref, b1_ref,
                          w2_ref, b2_ref, oT_ref):
    """One batch tile: [in_size, TB] -> [1, TB]; f32 accumulation on the MXU."""
    f32 = jnp.float32

    # Layer 0: [width, in] @ [in, TB] -> [width, TB], bias + ReLU.
    h = jnp.dot(w0_ref[...], xT_ref[...], preferred_element_type=f32)
    h = jnp.maximum(h + b0_ref[...], 0.0)

    # Layer 1: [width, width] @ [width, TB] -> [width, TB], bias + ReLU.
    h = jnp.dot(w1_ref[...], h.astype(w1_ref.dtype), preferred_element_type=f32)
    h = jnp.maximum(h + b1_ref[...], 0.0)

    # Layer 2: [1, width] @ [width, TB] -> [1, TB]  (lane-dense output block).
    out = jnp.dot(w2_ref[...], h.astype(w2_ref.dtype), preferred_element_type=f32)
    oT_ref[...] = (out + b2_ref[...]).astype(oT_ref.dtype)


def _round_up(n, m):
    return (n + m - 1) // m * m


def _pick_batch_tile(batch):
    """Rows per grid step (multiple of 128); smaller on v7x (64 MiB VMEM)."""
    try:
        vmem_bytes = pltpu.get_tpu_info().vmem_capacity_bytes
    except Exception:
        vmem_bytes = 128 * 1024 * 1024
    max_tile = 512 if vmem_bytes >= 100 * 1024 * 1024 else 256
    return min(max_tile, _round_up(max(batch, 1), 128))


def discriminator_forward(x, params, *, batch_tile=None, compute_dtype=None):
    """x: [B, in_size]. params: weights [out,in], biases [out,1]. Returns [B,1] f32."""
    w0, b0 = params["w0"], params["b0"]
    w1, b1 = params["w1"], params["b1"]
    w2, b2 = params["w2"], params["b2"]

    B, in_size = x.shape
    width = w0.shape[0]

    if compute_dtype is not None:
        # bf16 inputs to the MXU on v6e/v7x; matmuls still accumulate in f32.
        x = x.astype(compute_dtype)
        w0, w1, w2 = (w.astype(compute_dtype) for w in (w0, w1, w2))

    tb = _round_up(batch_tile or _pick_batch_tile(B), 128)
    b_pad = _round_up(B, tb)
    if b_pad != B:
        x = jnp.pad(x, ((0, b_pad - B), (0, 0)))
    xT = x.T                      # [in_size, b_pad] -- batch on the lane axis.
    n_tiles = b_pad // tb

    itemsize = jnp.dtype(x.dtype).itemsize
    w_bytes = sum(int(a.size) * jnp.dtype(a.dtype).itemsize
                  for a in (w0, b0, w1, b1, w2, b2))
    # Double-buffered x / out streams + single-buffered params + f32 temps.
    vmem_budget = int(2 * in_size * tb * itemsize + 2 * tb * 4 + w_bytes
                      + 4 * width * tb * 4 + (16 << 20))

    flops = 2 * b_pad * (in_size * width + width * width + width)
    cost = pl.CostEstimate(
        flops=flops, transcendentals=0,
        bytes_accessed=int(xT.size) * itemsize + w_bytes + b_pad * 4)

    def _run(single_buffer_params):
        def const_spec(arr):
            kw = {}
            if single_buffer_params:
                kw["pipeline_mode"] = pl.Buffered(1)  # resident, never re-fetched
            return pl.BlockSpec(arr.shape, lambda i: (0,) * arr.ndim, **kw)

        call = pl.pallas_call(
            _discriminator_kernel,
            out_shape=jax.ShapeDtypeStruct((1, b_pad), jnp.float32),
            grid=(n_tiles,),
            in_specs=[
                pl.BlockSpec((in_size, tb), lambda i: (0, i)),
                const_spec(w0), const_spec(b0),
                const_spec(w1), const_spec(b1),
                const_spec(w2), const_spec(b2),
            ],
            out_specs=pl.BlockSpec((1, tb), lambda i: (0, i)),
            compiler_params=pltpu.CompilerParams(
                dimension_semantics=("parallel",),   # v7x: shard batch over 2 TCs
                vmem_limit_bytes=vmem_budget),
            cost_estimate=cost,
        )
        return call(xT, w0, b0, w1, b1, w2, b2)

    try:
        oT = _run(True)
    except Exception:
        # TODO(synk): this JAX build rejected pl.Buffered(1) single-buffering of
        # resident weights; fall back to default double buffering.
        oT = _run(False)

    return oT.T[:B].astype(jnp.float32)


def init_params(key, in_size, width, bias=True):
    """PyTorch nn.Linear-style init: uniform(+-1/sqrt(fan_in)); W is [out, in]."""
    ks = jax.random.split(key, 6)

    def linear(kw, kb, fan_in, fan_out):
        bound = 1.0 / jnp.sqrt(jnp.float32(fan_in))
        w = jax.random.uniform(kw, (fan_out, fan_in), jnp.float32, -bound, bound)
        if bias:
            b = jax.random.uniform(kb, (fan_out, 1), jnp.float32, -bound, bound)
        else:
            b = jnp.zeros((fan_out, 1), jnp.float32)
        return w, b

    w0, b0 = linear(ks[0], ks[1], in_size, width)   # Linear(in_size, width)
    w1, b1 = linear(ks[2], ks[3], width, width)     # Linear(width, width)
    w2, b2 = linear(ks[4], ks[5], width, 1)         # Linear(width, 1)
    return dict(w0=w0, b0=b0, w1=w1, b1=b1, w2=w2, b2=b2)


def reference_forward(x, params):
    """Pure-JAX reference of the same MLP."""
    h = jnp.maximum(x @ params["w0"].T + params["b0"][:, 0], 0.0)
    h = jnp.maximum(h @ params["w1"].T + params["b1"][:, 0], 0.0)
    return h @ params["w2"].T + params["b2"][:, 0]


if __name__ == "__main__":
    # Discriminator(in_size=32, width=32, depth=2, bias=True)
    B, IN_SIZE, WIDTH = 200, 32, 32   # B deliberately NOT a multiple of 128

    key = jax.random.PRNGKey(0)
    k_params, k_x = jax.random.split(key)
    params = init_params(k_params, IN_SIZE, WIDTH, bias=True)
    x = jax.random.normal(k_x, (B, IN_SIZE), jnp.float32)

    out = discriminator_forward(x, params)
    out = jax.block_until_ready(out)

    ref = reference_forward(x, params)
    assert out.shape == (B, 1), out.shape
    assert jnp.allclose(out, ref, atol=1e-4, rtol=1e-4), "mismatch vs reference"

    print("KERNEL_OK")
</pallas_src>

<mosaic_0001>
module attributes {stable_mosaic.version = 11 : i64} {
  func.func @_discriminator_kernel(%arg0: i32, %arg1: memref<32x256xf32, #tpu.memory_space<vmem>>, %arg2: memref<32x32xf32, #tpu.memory_space<vmem>>, %arg3: memref<32x1xf32, #tpu.memory_space<vmem>>, %arg4: memref<32x32xf32, #tpu.memory_space<vmem>>, %arg5: memref<32x1xf32, #tpu.memory_space<vmem>>, %arg6: memref<1x32xf32, #tpu.memory_space<vmem>>, %arg7: memref<1x1xf32, #tpu.memory_space<vmem>>, %arg8: memref<1x256xf32, #tpu.memory_space<vmem>>) attributes {dimension_semantics = [#tpu.dimension_semantics<parallel>], iteration_bounds = array<i64: 1>, scalar_prefetch = 0 : i64, scratch_operands = 0 : i64, tpu.core_type = #tpu.core_type<tc>, window_params = [{transform_indices = @transform_0, window_bounds = array<i64: 32, 256>}, {pipeline_mode = #tpu.pipeline_mode<synchronous>, transform_indices = @transform_1, window_bounds = array<i64: 32, 32>}, {pipeline_mode = #tpu.pipeline_mode<synchronous>, transform_indices = @transform_2, window_bounds = array<i64: 32, 1>}, {pipeline_mode = #tpu.pipeline_mode<synchronous>, transform_indices = @transform_3, window_bounds = array<i64: 32, 32>}, {pipeline_mode = #tpu.pipeline_mode<synchronous>, transform_indices = @transform_4, window_bounds = array<i64: 32, 1>}, {pipeline_mode = #tpu.pipeline_mode<synchronous>, transform_indices = @transform_5, window_bounds = array<i64: 1, 32>}, {pipeline_mode = #tpu.pipeline_mode<synchronous>, transform_indices = @transform_6, window_bounds = array<i64: 1, 1>}, {transform_indices = @transform_7, window_bounds = array<i64: 1, 256>}]} {
    %c0 = arith.constant 0 : index
    %c0_0 = arith.constant 0 : index
    %0 = vector.load %arg2[%c0, %c0_0] : memref<32x32xf32, #tpu.memory_space<vmem>>, vector<32x32xf32>
    %c0_1 = arith.constant 0 : index
    %c0_2 = arith.constant 0 : index
    %1 = vector.load %arg1[%c0_1, %c0_2] : memref<32x256xf32, #tpu.memory_space<vmem>>, vector<32x256xf32>
    %cst = arith.constant dense<0.000000e+00> : vector<32x256xf32>
    %2 = tpu.matmul %0, %1, %cst {dimension_numbers = #tpu.dot_dimension_numbers<[1], [0], [0], [1], [0, 0, 1, 1], [], []>} : vector<32x32xf32>, vector<32x256xf32>, vector<32x256xf32> -> vector<32x256xf32>
    %c0_3 = arith.constant 0 : index
    %c0_4 = arith.constant 0 : index
    %3 = vector.load %arg3[%c0_3, %c0_4] : memref<32x1xf32, #tpu.memory_space<vmem>>, vector<32x1xf32>
    %4 = vector.broadcast %3 : vector<32x1xf32> to vector<32x256xf32>
    %5 = arith.addf %2, %4 : vector<32x256xf32>
    %cst_5 = arith.constant 0.000000e+00 : f32
    %6 = vector.broadcast %cst_5 : f32 to vector<32x256xf32>
    %7 = arith.maximumf %5, %6 : vector<32x256xf32>
    %c0_6 = arith.constant 0 : index
    %c0_7 = arith.constant 0 : index
    %8 = vector.load %arg4[%c0_6, %c0_7] : memref<32x32xf32, #tpu.memory_space<vmem>>, vector<32x32xf32>
    %cst_8 = arith.constant dense<0.000000e+00> : vector<32x256xf32>
    %9 = tpu.matmul %8, %7, %cst_8 {dimension_numbers = #tpu.dot_dimension_numbers<[1], [0], [0], [1], [0, 0, 1, 1], [], []>} : vector<32x32xf32>, vector<32x256xf32>, vector<32x256xf32> -> vector<32x256xf32>
    %c0_9 = arith.constant 0 : index
    %c0_10 = arith.constant 0 : index
    %10 = vector.load %arg5[%c0_9, %c0_10] : memref<32x1xf32, #tpu.memory_space<vmem>>, vector<32x1xf32>
    %11 = vector.broadcast %10 : vector<32x1xf32> to vector<32x256xf32>
    %12 = arith.addf %9, %11 : vector<32x256xf32>
    %cst_11 = arith.constant 0.000000e+00 : f32
    %13 = vector.broadcast %cst_11 : f32 to vector<32x256xf32>
    %14 = arith.maximumf %12, %13 : vector<32x256xf32>
    %c0_12 = arith.constant 0 : index
    %c0_13 = arith.constant 0 : index
    %15 = vector.load %arg6[%c0_12, %c0_13] : memref<1x32xf32, #tpu.memory_space<vmem>>, vector<1x32xf32>
    %cst_14 = arith.constant dense<0.000000e+00> : vector<1x256xf32>
    %16 = tpu.matmul %15, %14, %cst_14 {dimension_numbers = #tpu.dot_dimension_numbers<[1], [0], [0], [1], [0, 0, 1, 1], [], []>} : vector<1x32xf32>, vector<32x256xf32>, vector<1x256xf32> -> vector<1x256xf32>
    %c0_15 = arith.constant 0 : index
    %c0_16 = arith.constant 0 : index
    %17 = vector.load %arg7[%c0_15, %c0_16] : memref<1x1xf32, #tpu.memory_space<vmem>>, vector<1x1xf32>
    %18 = vector.broadcast %17 : vector<1x1xf32> to vector<1x256xf32>
    %19 = arith.addf %16, %18 : vector<1x256xf32>
    %c0_17 = arith.constant 0 : index
    %c0_18 = arith.constant 0 : index
    %20 = vector.load %arg8[%c0_17, %c0_18] : memref<1x256xf32, #tpu.memory_space<vmem>>, vector<1x256xf32>
    tpu.vector_store %arg8[%c0_17, %c0_18], %19 {strides = array<i32>} : memref<1x256xf32, #tpu.memory_space<vmem>>, vector<1x256xf32>,
    return
  }
  func.func @transform_0(%arg0: i32) -> (i32, i32) {
    %c0_i32 = arith.constant 0 : i32
    %c0_i32_0 = arith.constant 0 : i32
    return %c0_i32, %arg0 : i32, i32
  }
  func.func @transform_1(%arg0: i32) -> (i32, i32) {
    %c0_i32 = arith.constant 0 : i32
    %c0_i32_0 = arith.constant 0 : i32
    %c0_i32_1 = arith.constant 0 : i32
    return %c0_i32, %c0_i32_0 : i32, i32
  }
  func.func @transform_2(%arg0: i32) -> (i32, i32) {
    %c0_i32 = arith.constant 0 : i32
    %c0_i32_0 = arith.constant 0 : i32
    %c0_i32_1 = arith.constant 0 : i32
    return %c0_i32, %c0_i32_0 : i32, i32
  }
  func.func @transform_3(%arg0: i32) -> (i32, i32) {
    %c0_i32 = arith.constant 0 : i32
    %c0_i32_0 = arith.constant 0 : i32
    %c0_i32_1 = arith.constant 0 : i32
    return %c0_i32, %c0_i32_0 : i32, i32
  }
  func.func @transform_4(%arg0: i32) -> (i32, i32) {
    %c0_i32 = arith.constant 0 : i32
    %c0_i32_0 = arith.constant 0 : i32
    %c0_i32_1 = arith.constant 0 : i32
    return %c0_i32, %c0_i32_0 : i32, i32
  }
  func.func @transform_5(%arg0: i32) -> (i32, i32) {
    %c0_i32 = arith.constant 0 : i32
    %c0_i32_0 = arith.constant 0 : i32
    %c0_i32_1 = arith.constant 0 : i32
    return %c0_i32, %c0_i32_0 : i32, i32
  }
  func.func @transform_6(%arg0: i32) -> (i32, i32) {
    %c0_i32 = arith.constant 0 : i32
    %c0_i32_0 = arith.constant 0 : i32
    %c0_i32_1 = arith.constant 0 : i32
    return %c0_i32, %c0_i32_0 : i32, i32
  }
  func.func @transform_7(%arg0: i32) -> (i32, i32) {
    %c0_i32 = arith.constant 0 : i32
    %c0_i32_0 = arith.constant 0 : i32
    return %c0_i32, %arg0 : i32, i32
  }
}

module attributes {stable_mosaic.version = 11 : i64} {
  func.func @_discriminator_kernel(%arg0: i32, %arg1: memref<32x256xf32, #tpu.memory_space<vmem>>, %arg2: memref<32x32xf32, #tpu.memory_space<vmem>>, %arg3: memref<32x1xf32, #tpu.memory_space<vmem>>, %arg4: memref<32x32xf32, #tpu.memory_space<vmem>>, %arg5: memref<32x1xf32, #tpu.memory_space<vmem>>, %arg6: memref<1x32xf32, #tpu.memory_space<vmem>>, %arg7: memref<1x1xf32, #tpu.memory_space<vmem>>, %arg8: memref<1x256xf32, #tpu.memory_space<vmem>>) attributes {dimension_semantics = [#tpu.dimension_semantics<parallel>], iteration_bounds = array<i64: 1>, scalar_prefetch = 0 : i64, scratch_operands = 0 : i64, tpu.core_type = #tpu.core_type<tc>, window_params = [{transform_indices = @transform_0, window_bounds = array<i64: 32, 256>}, {pipeline_mode = #tpu.pipeline_mode<synchronous>, transform_indices = @transform_1, window_bounds = array<i64: 32, 32>}, {pipeline_mode = #tpu.pipeline_mode<synchronous>, transform_indices = @transform_2, window_bounds = array<i64: 32, 1>}, {pipeline_mode = #tpu.pipeline_mode<synchronous>, transform_indices = @transform_3, window_bounds = array<i64: 32, 32>}, {pipeline_mode = #tpu.pipeline_mode<synchronous>, transform_indices = @transform_4, window_bounds = array<i64: 32, 1>}, {pipeline_mode = #tpu.pipeline_mode<synchronous>, transform_indices = @transform_5, window_bounds = array<i64: 1, 32>}, {pipeline_mode = #tpu.pipeline_mode<synchronous>, transform_indices = @transform_6, window_bounds = array<i64: 1, 1>}, {transform_indices = @transform_7, window_bounds = array<i64: 1, 256>}]} {
    %c0 = arith.constant 0 : index
    %c0_0 = arith.constant 0 : index
    %0 = vector.load %arg2[%c0, %c0_0] : memref<32x32xf32, #tpu.memory_space<vmem>>, vector<32x32xf32>
    %c0_1 = arith.constant 0 : index
    %c0_2 = arith.constant 0 : index
    %1 = vector.load %arg1[%c0_1, %c0_2] : memref<32x256xf32, #tpu.memory_space<vmem>>, vector<32x256xf32>
    %cst = arith.constant dense<0.000000e+00> : vector<32x256xf32>
    %2 = tpu.matmul %0, %1, %cst {dimension_numbers = #tpu.dot_dimension_numbers<[1], [0], [0], [1], [0, 0, 1, 1], [], []>} : vector<32x32xf32>, vector<32x256xf32>, vector<32x256xf32> -> vector<32x256xf32>
    %c0_3 = arith.constant 0 : index
    %c0_4 = arith.constant 0 : index
    %3 = vector.load %arg3[%c0_3, %c0_4] : memref<32x1xf32, #tpu.memory_space<vmem>>, vector<32x1xf32>
    %4 = vector.broadcast %3 : vector<32x1xf32> to vector<32x256xf32>
    %5 = arith.addf %2, %4 : vector<32x256xf32>
    %cst_5 = arith.constant 0.000000e+00 : f32
    %6 = vector.broadcast %cst_5 : f32 to vector<32x256xf32>
    %7 = arith.maximumf %5, %6 : vector<32x256xf32>
    %c0_6 = arith.constant 0 : index
    %c0_7 = arith.constant 0 : index
    %8 = vector.load %arg4[%c0_6, %c0_7] : memref<32x32xf32, #tpu.memory_space<vmem>>, vector<32x32xf32>
    %cst_8 = arith.constant dense<0.000000e+00> : vector<32x256xf32>
    %9 = tpu.matmul %8, %7, %cst_8 {dimension_numbers = #tpu.dot_dimension_numbers<[1], [0], [0], [1], [0, 0, 1, 1], [], []>} : vector<32x32xf32>, vector<32x256xf32>, vector<32x256xf32> -> vector<32x256xf32>
    %c0_9 = arith.constant 0 : index
    %c0_10 = arith.constant 0 : index
    %10 = vector.load %arg5[%c0_9, %c0_10] : memref<32x1xf32, #tpu.memory_space<vmem>>, vector<32x1xf32>
    %11 = vector.broadcast %10 : vector<32x1xf32> to vector<32x256xf32>
    %12 = arith.addf %9, %11 : vector<32x256xf32>
    %cst_11 = arith.constant 0.000000e+00 : f32
    %13 = vector.broadcast %cst_11 : f32 to vector<32x256xf32>
    %14 = arith.maximumf %12, %13 : vector<32x256xf32>
    %c0_12 = arith.constant 0 : index
    %c0_13 = arith.constant 0 : index
    %15 = vector.load %arg6[%c0_12, %c0_13] : memref<1x32xf32, #tpu.memory_space<vmem>>, vector<1x32xf32>
    %cst_14 = arith.constant dense<0.000000e+00> : vector<1x256xf32>
    %16 = tpu.matmul %15, %14, %cst_14 {dimension_numbers = #tpu.dot_dimension_numbers<[1], [0], [0], [1], [0, 0, 1, 1], [], []>} : vector<1x32xf32>, vector<32x256xf32>, vector<1x256xf32> -> vector<1x256xf32>
    %c0_15 = arith.constant 0 : index
    %c0_16 = arith.constant 0 : index
    %17 = vector.load %arg7[%c0_15, %c0_16] : memref<1x1xf32, #tpu.memory_space<vmem>>, vector<1x1xf32>
    %18 = vector.broadcast %17 : vector<1x1xf32> to vector<1x256xf32>
    %19 = arith.addf %16, %18 : vector<1x256xf32>
    %c0_17 = arith.constant 0 : index
    %c0_18 = arith.constant 0 : index
    %20 = vector.load %arg8[%c0_17, %c0_18] : memref<1x256xf32, #tpu.memory_space<vmem>>, vector<1x256xf32>
    tpu.vector_store %arg8[%c0_17, %c0_18], %19 {strides = array<i32>} : memref<1x256xf32, #tpu.memory_space<vmem>>, vector<1x256xf32>,
    return
  }
  func.func @transform_0(%arg0: i32) -> (i32, i32) {
    %c0_i32 = arith.constant 0 : i32
    %c0_i32_0 = arith.constant 0 : i32
    return %c0_i32, %arg0 : i32, i32
  }
  func.func @transform_1(%arg0: i32) -> (i32, i32) {
    %c0_i32 = arith.constant 0 : i32
    %c0_i32_0 = arith.constant 0 : i32
    %c0_i32_1 = arith.constant 0 : i32
    return %c0_i32, %c0_i32_0 : i32, i32
  }
  func.func @transform_2(%arg0: i32) -> (i32, i32) {
    %c0_i32 = arith.constant 0 : i32
    %c0_i32_0 = arith.constant 0 : i32
    %c0_i32_1 = arith.constant 0 : i32
    return %c0_i32, %c0_i32_0 : i32, i32
  }
  func.func @transform_3(%arg0: i32) -> (i32, i32) {
    %c0_i32 = arith.constant 0 : i32
    %c0_i32_0 = arith.constant 0 : i32
    %c0_i32_1 = arith.constant 0 : i32
    return %c0_i32, %c0_i32_0 : i32, i32
  }
  func.func @transform_4(%arg0: i32) -> (i32, i32) {
    %c0_i32 = arith.constant 0 : i32
    %c0_i32_0 = arith.constant 0 : i32
    %c0_i32_1 = arith.constant 0 : i32
    return %c0_i32, %c0_i32_0 : i32, i32
  }
  func.func @transform_5(%arg0: i32) -> (i32, i32) {
    %c0_i32 = arith.constant 0 : i32
    %c0_i32_0 = arith.constant 0 : i32
    %c0_i32_1 = arith.constant 0 : i32
    return %c0_i32, %c0_i32_0 : i32, i32
  }
  func.func @transform_6(%arg0: i32) -> (i32, i32) {
    %c0_i32 = arith.constant 0 : i32
    %c0_i32_0 = arith.constant 0 : i32
    %c0_i32_1 = arith.constant 0 : i32
    return %c0_i32, %c0_i32_0 : i32, i32
  }
  func.func @transform_7(%arg0: i32) -> (i32, i32) {
    %c0_i32 = arith.constant 0 : i32
    %c0_i32_0 = arith.constant 0 : i32
    return %c0_i32, %arg0 : i32, i32
  }
}

</mosaic_0001>

<llo_original>
// kernel: tpu_custom_call.1
$region0: #{tpu_custom_call.1}
  #allocation0 [shape = 'u32[]', space=smem, size = 0x4, offset = 0x4, fixed_abs, tag = 'smem constant byte address 0x4 - core index']
  #allocation1 [shape = 'u32[144,128]{1,0:T(1,128)}', space=vmem, size = 0x12000, scoped, tag = 'internal scratch']
  #allocation2 [shape = 'f32[1,1]{1,0:T(1,128)S(1)}', space=vmem, size = 0x200, scoped, tag = 'scoped memory for tpu_custom_call.1']
  %s0 = inlined_call_operand.vmem [shape: f32[32,256], index: 0, kind: input, shape index: {}]
  %s1 = inlined_call_operand.hbm [shape: f32[32,32], index: 1, kind: input, shape index: {}]
  %s2 = inlined_call_operand.vmem [shape: f32[32,1], index: 2, kind: input, shape index: {}]
  %s3 = inlined_call_operand.hbm [shape: f32[32,32], index: 3, kind: input, shape index: {}]
  %s4 = inlined_call_operand.vmem [shape: f32[32,1], index: 4, kind: input, shape index: {}]
  %s5 = inlined_call_operand.vmem [shape: f32[1,32], index: 5, kind: input, shape index: {}]
  %s6 = inlined_call_operand.<no memory space> [shape: f32[1,1], index: 6, kind: input, shape index: {}]
  %s7 = inlined_call_operand.hbm [shape: f32[1,256], index: 7, kind: output, shape index: {}]
  %s8 = sld [smem:[#allocation0]]
  $region46: #{tpu_custom_call.1} parent=0
    _
  %s10 = ssub.s32 1, %s8
  %s11 = scalar_select 0, %s10, %s8
  %v12 = vstv %s6
  %13 = vst [vmem:[#allocation2] sm:$0x1] %v12
  $region1: #{tpu_custom_call.1} parent=0
    #allocation3 [shape = 'u8[16384]{0}', space=vmem, size = 0x4000, scoped, tag = 'input window, operand 1, single buffered']
    #allocation4 [shape = 's32[1]{0}', space=sflag, size = 0x4, scoped, tag = 'scoped memory for tpu_custom_call.1']
    #allocation5 [shape = 's32[1]{0}', space=sflag, size = 0x4, scoped, tag = 'scoped memory for tpu_custom_call.1']
    #allocation6 [shape = 'u8[16384]{0}', space=vmem, size = 0x4000, scoped, tag = 'input window, operand 3, single buffered']
    #allocation7 [shape = 's32[1]{0}', space=sflag, size = 0x4, scoped, tag = 'scoped memory for tpu_custom_call.1']
    #allocation8 [shape = 'u8[1024]{0}', space=vmem, size = 0x400, scoped, tag = 'output window, operand 0, single buffered']
    %14 = vsyncpa [#allocation4], 0
    %15 = vsyncpa [#allocation7], 0
    %16 = vsyncpa [#allocation5], 0
    // Predicated region
    $region2: #{tpu_custom_call.1} parent=1 // pred_check
      _
    $region3: #{tpu_custom_call.1} parent=1 // pred_check_branch
      %18 = sbr.rel (0) target = $region5
    $region4: #{tpu_custom_call.1} parent=1 // pred_region
      _
    $region5: #{tpu_custom_call.1} parent=1 // pred_fallthru
      _
    // Predicated region
    $region6: #{tpu_custom_call.1} parent=1 // pred_check
      _
    $region7: #{tpu_custom_call.1} parent=1 // pred_check_branch
      %20 = sbr.rel (0) target = $region9
    $region8: #{tpu_custom_call.1} parent=1 // pred_region
      %s22 = ssub.s32 512, 512
      %23 = vsyncadd [#allocation4], %s22
      %s24 = sshll.u32 [#allocation3], 4
      %s25 = int_to_ptr.vmem [resolvable:$true] %s24
      %30 = dma.hbm_to_vmem [thread:$0]  %s1, 512, %s25, [#allocation4], 128, 128, 8
    $region9: #{tpu_custom_call.1} parent=1 // pred_fallthru
      _
    // Predicated region
    $region10: #{tpu_custom_call.1} parent=1 // pred_check
      _
    $region11: #{tpu_custom_call.1} parent=1 // pred_check_branch
      %32 = sbr.rel (0) target = $region13
    $region12: #{tpu_custom_call.1} parent=1 // pred_region
      _
    $region13: #{tpu_custom_call.1} parent=1 // pred_fallthru
      _
    // Predicated region
    $region14: #{tpu_custom_call.1} parent=1 // pred_check
      _
    $region15: #{tpu_custom_call.1} parent=1 // pred_check_branch
      %34 = sbr.rel (0) target = $region17
    $region16: #{tpu_custom_call.1} parent=1 // pred_region
      %s36 = ssub.s32 512, 512
      %37 = vsyncadd [#allocation7], %s36
      %s38 = sshll.u32 [#allocation6], 4
      %s39 = int_to_ptr.vmem [resolvable:$true] %s38
      %44 = dma.hbm_to_vmem [thread:$0]  %s3, 512, %s39, [#allocation7], 128, 128, 8
    $region17: #{tpu_custom_call.1} parent=1 // pred_fallthru
      _
    // Predicated region
    $region18: #{tpu_custom_call.1} parent=1 // pred_check
      _
    $region19: #{tpu_custom_call.1} parent=1 // pred_check_branch
      %46 = sbr.rel (0) target = $region21
    $region20: #{tpu_custom_call.1} parent=1 // pred_region
      _
    $region21: #{tpu_custom_call.1} parent=1 // pred_fallthru
      _
    // Predicated region
    $region22: #{tpu_custom_call.1} parent=1 // pred_check
      _
    $region23: #{tpu_custom_call.1} parent=1 // pred_check_branch
      %48 = sbr.rel (0) target = $region25
    $region24: #{tpu_custom_call.1} parent=1 // pred_region
      _
    $region25: #{tpu_custom_call.1} parent=1 // pred_fallthru
      _
    // Predicated region
    $region26: #{tpu_custom_call.1} parent=1 // pred_check
      _
    $region27: #{tpu_custom_call.1} parent=1 // pred_check_branch
      %50 = sbr.rel (0) target = $region29
    $region28: #{tpu_custom_call.1} parent=1 // pred_region
      _
    $region29: #{tpu_custom_call.1} parent=1 // pred_fallthru
      _
    // Predicated region
    $region30: #{tpu_custom_call.1} parent=1 // pred_check
      _
    $region31: #{tpu_custom_call.1} parent=1 // pred_check_branch
      %52 = sbr.rel (0) target = $region33
    $region32: #{tpu_custom_call.1} parent=1 // pred_region
      %53 = dma.done [#allocation4], 512
    $region33: #{tpu_custom_call.1} parent=1 // pred_fallthru
      _
    // Predicated region
    $region34: #{tpu_custom_call.1} parent=1 // pred_check
      _
    $region35: #{tpu_custom_call.1} parent=1 // pred_check_branch
      %55 = sbr.rel (0) target = $region37
    $region36: #{tpu_custom_call.1} parent=1 // pred_region
      %56 = dma.done [#allocation7], 512
    $region37: #{tpu_custom_call.1} parent=1 // pred_fallthru
      _
    %v57 = vld [vmem:[#allocation3] sm:$0xff]
    %v58 = vld [vmem:[#allocation3 + $0x8] sm:$0xff]
    %v59 = vld [vmem:[#allocation3 + $0x10] sm:$0xff]
    %v60 = vld [vmem:[#allocation3 + $0x18] sm:$0xff]
    %v61 = vld [vmem:[%s0] sm:$0xff]
    %v62 = vld [vmem:[%s0 + $0x8] sm:$0xff]
    %v63 = vld [vmem:[%s0 + $0x10] sm:$0xff]
    %v64 = vld [vmem:[%s0 + $0x18] sm:$0xff]
    %v65 = vld [vmem:[%s0 + $0x20] sm:$0xff]
    %v66 = vld [vmem:[%s0 + $0x28] sm:$0xff]
    %v67 = vld [vmem:[%s0 + $0x30] sm:$0xff]
    %v68 = vld [vmem:[%s0 + $0x38] sm:$0xff]
    %v69 = vld [vmem:[%s2] sm:$0xff]
    %v70 = vld [vmem:[%s2 + $0x8] sm:$0xff]
    %v71 = vld [vmem:[%s2 + $0x10] sm:$0xff]
    %v72 = vld [vmem:[%s2 + $0x18] sm:$0xff]
    %74 = vset.pattern.permute.xlu0 0
    %75 = vperm.xlu0 %74, %v69
    %v76 = vpop.permute.xlu0 %75
    %79 = vset.pattern.permute.xlu0 0
    %80 = vperm.xlu0 %79, %v70
    %v81 = vpop.permute.xlu0 %80
    %84 = vset.pattern.permute.xlu0 0
    %85 = vperm.xlu0 %84, %v71
    %v86 = vpop.permute.xlu0 %85
    %89 = vset.pattern.permute.xlu0 0
    %90 = vperm.xlu0 %89, %v72
    %v91 = vpop.permute.xlu0 %90
    %vm93 = vcmask 261120
    %v95 = vsel %vm93, %v57, 0
    %v98 = vsel %vm93, %v58, 0
    %v101 = vsel %vm93, %v59, 0
    %v104 = vsel %vm93, %v60, 0
    %106 = vmatprep.subr.mxu0 %v62
    %107 = vmatpush1.msra.mxu0 %v61
    %108 = vmatprep.subr.mxu0 %v64
    %109 = vmatpush1.msra.mxu0 %v63
    %110 = vmatprep.subr.mxu0 %v66
    %111 = vmatpush1.msra.mxu0 %v65
    %112 = vmatprep.subr.mxu0 %v68
    %113 = vmatpush1.msra.mxu0 %v67
    %114 = vmatprep.subr.mxu0 0.0
    %115 = vmatpush1.msra.mxu0 0.0
    %116 = vmatprep.subr.mxu0 0.0
    %117 = vmatpush1.msra.mxu0 0.0
    %118 = vmatprep.subr.mxu0 0.0
    %119 = vmatpush1.msra.mxu0 0.0
    %120 = vmatprep.subr.mxu0 0.0
    %121 = vmatpush1.msra.mxu0 0.0
    %122 = vmatprep.subr.mxu0 0.0
    %123 = vmatpush1.msra.mxu0 0.0
    %124 = vmatprep.subr.mxu0 0.0
    %125 = vmatpush1.msra.mxu0 0.0
    %126 = vmatprep.subr.mxu0 0.0
    %127 = vmatpush1.msra.mxu0 0.0
    %128 = vmatprep.subr.mxu0 0.0
    %129 = vmatpush1.msra.mxu0 0.0
    %130 = vmatprep.subr.mxu0 0.0
    %131 = vmatpush1.msra.mxu0 0.0
    %132 = vmatprep.subr.mxu0 0.0
    %133 = vmatpush1.msra.mxu0 0.0
    %134 = vmatprep.subr.mxu0 0.0
    %135 = vmatpush1.msra.mxu0 0.0
    %136 = vmatprep.subr.mxu0 0.0
    %137 = vmatpush1.msra.mxu0 0.0
    %138 = vmatprep.subr.mxu0 0.0
    %139 = vmatpush1.msra.mxu0 0.0
    %140 = vmatprep.subr.mxu0 0.0
    %141 = vmatpush1.msra.mxu0 0.0
    %142 = vmatprep.subr.mxu0 0.0
    %143 = vmatpush1.msra.mxu0 0.0
    %144 = vmatprep.subr.mxu0 0.0
    %145 = vmatpush1.msra.mxu0 0.0
    %146 = vmatprep.subr.mxu0 0.0
    %147 = vmatpush1.msra.mxu0 0.0
    %148 = vmatprep.subr.mxu0 0.0
    %149 = vmatpush1.msra.mxu0 0.0
    %150 = vmatprep.subr.mxu0 0.0
    %151 = vmatpush1.msra.mxu0 0.0
    %152 = vmatprep.subr.mxu0 0.0
    %153 = vmatpush1.msra.mxu0 0.0
    %154 = vmatprep.subr.mxu0 0.0
    %155 = vmatpush1.msra.mxu0 0.0
    %156 = vmatprep.subr.mxu0 0.0
    %157 = vmatpush1.msra.mxu0 0.0
    %158 = vmatprep.subr.mxu0 0.0
    %159 = vmatpush1.msra.mxu0 0.0
    %160 = vmatprep.subr.mxu0 0.0
    %161 = vmatpush1.msra.mxu0 0.0
    %162 = vmatprep.subr.mxu0 0.0
    %163 = vmatpush1.msra.mxu0 0.0
    %164 = vmatprep.subr.mxu0 0.0
    %165 = vmatpush1.msra.mxu0 0.0
    %166 = vmatprep.subr.mxu0 0.0
    %167 = vmatpush1.msra.mxu0 0.0
    %168 = vmatprep.subr.mxu0 0.0
    %169 = vmatpush1.msra.mxu0 0.0
    %170 = vmatprep.mubr.f32.mxu0 0.0
    %171 = vmatmul.mubr.f32.gmra.mrb[0].mxu0 %v95
    %v172 = vpop.f32.mrb[0].mxu0
    %v173 = vadd.f32 %v76, %v172
    %v174 = vpop.f32.mrb[0].mxu0
    %v175 = vadd.f32 %v76, %v174
    %176 = vmatprep.mubr.f32.mxu0 0.0
    %177 = vmatmul.mubr.f32.gmra.mrb[0].mxu0 %v98
    %v178 = vpop.f32.mrb[0].mxu0
    %v179 = vadd.f32 %v81, %v178
    %v180 = vpop.f32.mrb[0].mxu0
    %v181 = vadd.f32 %v81, %v180
    %182 = vmatprep.mubr.f32.mxu0 0.0
    %183 = vmatmul.mubr.f32.gmra.mrb[0].mxu0 %v101
    %v184 = vpop.f32.mrb[0].mxu0
    %v185 = vadd.f32 %v86, %v184
    %v186 = vpop.f32.mrb[0].mxu0
    %v187 = vadd.f32 %v86, %v186
    %188 = vmatprep.mubr.f32.mxu0 0.0
    %189 = vmatmul.mubr.f32.gmra.mrb[0].mxu0 %v104
    %v190 = vpop.f32.mrb[0].mxu0
    %v191 = vadd.f32 %v91, %v190
    %v192 = vpop.f32.mrb[0].mxu0
    %v193 = vadd.f32 %v91, %v192
    %194 = vdwg.mxu0
    %v195 = vmax.f32 %v173, 0.0
    %v196 = vmax.f32 %v175, 0.0
    %v197 = vmax.f32 %v179, 0.0
    %v198 = vmax.f32 %v181, 0.0
    %v199 = vmax.f32 %v185, 0.0
    %v200 = vmax.f32 %v187, 0.0
    %v201 = vmax.f32 %v191, 0.0
    %v202 = vmax.f32 %v193, 0.0
    %v203 = vld [vmem:[#allocation6] sm:$0xff]
    %v204 = vld [vmem:[#allocation6 + $0x8] sm:$0xff]
    %v205 = vld [vmem:[#allocation6 + $0x10] sm:$0xff]
    %v206 = vld [vmem:[#allocation6 + $0x18] sm:$0xff]
    %v207 = vld [vmem:[%s4] sm:$0xff]
    %v208 = vld [vmem:[%s4 + $0x8] sm:$0xff]
    %v209 = vld [vmem:[%s4 + $0x10] sm:$0xff]
    %v210 = vld [vmem:[%s4 + $0x18] sm:$0xff]
    %212 = vset.pattern.permute.xlu0 0
    %213 = vperm.xlu0 %212, %v207
    %v214 = vpop.permute.xlu0 %213
    %217 = vset.pattern.permute.xlu0 0
    %218 = vperm.xlu0 %217, %v208
    %v219 = vpop.permute.xlu0 %218
    %222 = vset.pattern.permute.xlu0 0
    %223 = vperm.xlu0 %222, %v209
    %v224 = vpop.permute.xlu0 %223
    %227 = vset.pattern.permute.xlu0 0
    %228 = vperm.xlu0 %227, %v210
    %v229 = vpop.permute.xlu0 %228
    %v232 = vsel %vm93, %v203, 0
    %v235 = vsel %vm93, %v204, 0
    %v238 = vsel %vm93, %v205, 0
    %v241 = vsel %vm93, %v206, 0
    %243 = vmatprep.subr.mxu0 %v196
    %244 = vmatpush1.msra.mxu0 %v195
    %245 = vmatprep.subr.mxu0 %v198
    %246 = vmatpush1.msra.mxu0 %v197
    %247 = vmatprep.subr.mxu0 %v200
    %248 = vmatpush1.msra.mxu0 %v199
    %249 = vmatprep.subr.mxu0 %v202
    %250 = vmatpush1.msra.mxu0 %v201
    %251 = vmatprep.subr.mxu0 0.0
    %252 = vmatpush1.msra.mxu0 0.0
    %253 = vmatprep.subr.mxu0 0.0
    %254 = vmatpush1.msra.mxu0 0.0
    %255 = vmatprep.subr.mxu0 0.0
    %256 = vmatpush1.msra.mxu0 0.0
    %257 = vmatprep.subr.mxu0 0.0
    %258 = vmatpush1.msra.mxu0 0.0
    %259 = vmatprep.subr.mxu0 0.0
    %260 = vmatpush1.msra.mxu0 0.0
    %261 = vmatprep.subr.mxu0 0.0
    %262 = vmatpush1.msra.mxu0 0.0
    %263 = vmatprep.subr.mxu0 0.0
    %264 = vmatpush1.msra.mxu0 0.0
    %265 = vmatprep.subr.mxu0 0.0
    %266 = vmatpush1.msra.mxu0 0.0
    %267 = vmatprep.subr.mxu0 0.0
    %268 = vmatpush1.msra.mxu0 0.0
    %269 = vmatprep.subr.mxu0 0.0
    %270 = vmatpush1.msra.mxu0 0.0
    %271 = vmatprep.subr.mxu0 0.0
    %272 = vmatpush1.msra.mxu0 0.0
    %273 = vmatprep.subr.mxu0 0.0
    %274 = vmatpush1.msra.mxu0 0.0
    %275 = vmatprep.subr.mxu0 0.0
    %276 = vmatpush1.msra.mxu0 0.0
    %277 = vmatprep.subr.mxu0 0.0
    %278 = vmatpush1.msra.mxu0 0.0
    %279 = vmatprep.subr.mxu0 0.0
    %280 = vmatpush1.msra.mxu0 0.0
    %281 = vmatprep.subr.mxu0 0.0
    %282 = vmatpush1.msra.mxu0 0.0
    %283 = vmatprep.subr.mxu0 0.0
    %284 = vmatpush1.msra.mxu0 0.0
    %285 = vmatprep.subr.mxu0 0.0
    %286 = vmatpush1.msra.mxu0 0.0
    %287 = vmatprep.subr.mxu0 0.0
    %288 = vmatpush1.msra.mxu0 0.0
    %289 = vmatprep.subr.mxu0 0.0
    %290 = vmatpush1.msra.mxu0 0.0
    %291 = vmatprep.subr.mxu0 0.0
    %292 = vmatpush1.msra.mxu0 0.0
    %293 = vmatprep.subr.mxu0 0.0
    %294 = vmatpush1.msra.mxu0 0.0
    %295 = vmatprep.subr.mxu0 0.0
    %296 = vmatpush1.msra.mxu0 0.0
    %297 = vmatprep.subr.mxu0 0.0
    %298 = vmatpush1.msra.mxu0 0.0
    %299 = vmatprep.subr.mxu0 0.0
    %300 = vmatpush1.msra.mxu0 0.0
    %301 = vmatprep.subr.mxu0 0.0
    %302 = vmatpush1.msra.mxu0 0.0
    %303 = vmatprep.subr.mxu0 0.0
    %304 = vmatpush1.msra.mxu0 0.0
    %305 = vmatprep.subr.mxu0 0.0
    %306 = vmatpush1.msra.mxu0 0.0
    %307 = vmatprep.mubr.f32.mxu0 0.0
    %308 = vmatmul.mubr.f32.gmra.mrb[0].mxu0 %v232
    %v309 = vpop.f32.mrb[0].mxu0
    %v310 = vadd.f32 %v214, %v309
    %v311 = vpop.f32.mrb[0].mxu0
    %v312 = vadd.f32 %v214, %v311
    %313 = vmatprep.mubr.f32.mxu0 0.0
    %314 = vmatmul.mubr.f32.gmra.mrb[0].mxu0 %v235
    %v315 = vpop.f32.mrb[0].mxu0
    %v316 = vadd.f32 %v219, %v315
    %v317 = vpop.f32.mrb[0].mxu0
    %v318 = vadd.f32 %v219, %v317
    %319 = vmatprep.mubr.f32.mxu0 0.0
    %320 = vmatmul.mubr.f32.gmra.mrb[0].mxu0 %v238
    %v321 = vpop.f32.mrb[0].mxu0
    %v322 = vadd.f32 %v224, %v321
    %v323 = vpop.f32.mrb[0].mxu0
    %v324 = vadd.f32 %v224, %v323
    %325 = vmatprep.mubr.f32.mxu0 0.0
    %326 = vmatmul.mubr.f32.gmra.mrb[0].mxu0 %v241
    %v327 = vpop.f32.mrb[0].mxu0
    %v328 = vadd.f32 %v229, %v327
    %v329 = vpop.f32.mrb[0].mxu0
    %v330 = vadd.f32 %v229, %v329
    %331 = vdwg.mxu0
    %v332 = vmax.f32 %v310, 0.0
    %v333 = vmax.f32 %v312, 0.0
    %v334 = vmax.f32 %v316, 0.0
    %v335 = vmax.f32 %v318, 0.0
    %v336 = vmax.f32 %v322, 0.0
    %v337 = vmax.f32 %v324, 0.0
    %v338 = vmax.f32 %v328, 0.0
    %v339 = vmax.f32 %v330, 0.0
    %v340 = vld [vmem:[%s5] sm:$0x1]
    %v341 = vld [vmem:[#allocation2] sm:$0x1]
    %343 = vset.pattern.permute.xlu0 0
    %344 = vperm.xlu0 %343, %v341
    %v345 = vpop.permute.xlu0 %344
    %v347 = vlaneseq
    %v348 = vshrl.u32 %v347, 7
    %v349 = vsub.s32 0, %v348
    %v350 = vrot.slane %v345, %v349
    %v352 = vsel %vm93, %v340, 0
    %354 = vmatprep.subr.mxu0 %v333
    %355 = vmatpush1.msra.mxu0 %v332
    %356 = vmatprep.subr.mxu0 %v335
    %357 = vmatpush1.msra.mxu0 %v334
    %358 = vmatprep.subr.mxu0 %v337
    %359 = vmatpush1.msra.mxu0 %v336
    %360 = vmatprep.subr.mxu0 %v339
    %361 = vmatpush1.msra.mxu0 %v338
    %362 = vmatprep.subr.mxu0 0.0
    %363 = vmatpush1.msra.mxu0 0.0
    %364 = vmatprep.subr.mxu0 0.0
    %365 = vmatpush1.msra.mxu0 0.0
    %366 = vmatprep.subr.mxu0 0.0
    %367 = vmatpush1.msra.mxu0 0.0
    %368 = vmatprep.subr.mxu0 0.0
    %369 = vmatpush1.msra.mxu0 0.0
    %370 = vmatprep.subr.mxu0 0.0
    %371 = vmatpush1.msra.mxu0 0.0
    %372 = vmatprep.subr.mxu0 0.0
    %373 = vmatpush1.msra.mxu0 0.0
    %374 = vmatprep.subr.mxu0 0.0
    %375 = vmatpush1.msra.mxu0 0.0
    %376 = vmatprep.subr.mxu0 0.0
    %377 = vmatpush1.msra.mxu0 0.0
    %378 = vmatprep.subr.mxu0 0.0
    %379 = vmatpush1.msra.mxu0 0.0
    %380 = vmatprep.subr.mxu0 0.0
    %381 = vmatpush1.msra.mxu0 0.0
    %382 = vmatprep.subr.mxu0 0.0
    %383 = vmatpush1.msra.mxu0 0.0
    %384 = vmatprep.subr.mxu0 0.0
    %385 = vmatpush1.msra.mxu0 0.0
    %386 = vmatprep.subr.mxu0 0.0
    %387 = vmatpush1.msra.mxu0 0.0
    %388 = vmatprep.subr.mxu0 0.0
    %389 = vmatpush1.msra.mxu0 0.0
    %390 = vmatprep.subr.mxu0 0.0
    %391 = vmatpush1.msra.mxu0 0.0
    %392 = vmatprep.subr.mxu0 0.0
    %393 = vmatpush1.msra.mxu0 0.0
    %394 = vmatprep.subr.mxu0 0.0
    %395 = vmatpush1.msra.mxu0 0.0
    %396 = vmatprep.subr.mxu0 0.0
    %397 = vmatpush1.msra.mxu0 0.0
    %398 = vmatprep.subr.mxu0 0.0
    %399 = vmatpush1.msra.mxu0 0.0
    %400 = vmatprep.subr.mxu0 0.0
    %401 = vmatpush1.msra.mxu0 0.0
    %402 = vmatprep.subr.mxu0 0.0
    %403 = vmatpush1.msra.mxu0 0.0
    %404 = vmatprep.subr.mxu0 0.0
    %405 = vmatpush1.msra.mxu0 0.0
    %406 = vmatprep.subr.mxu0 0.0
    %407 = vmatpush1.msra.mxu0 0.0
    %408 = vmatprep.subr.mxu0 0.0
    %409 = vmatpush1.msra.mxu0 0.0
    %410 = vmatprep.subr.mxu0 0.0
    %411 = vmatpush1.msra.mxu0 0.0
    %412 = vmatprep.subr.mxu0 0.0
    %413 = vmatpush1.msra.mxu0 0.0
    %414 = vmatprep.subr.mxu0 0.0
    %415 = vmatpush1.msra.mxu0 0.0
    %416 = vmatprep.subr.mxu0 0.0
    %417 = vmatpush1.msra.mxu0 0.0
    %418 = vmatprep.mubr.f32.mxu0 0.0
    %419 = vmatmul.mubr.f32.gmra.mrb[0].mxu0 %v352
    %v420 = vpop.f32.mrb[0].mxu0
    %v421 = vadd.f32 %v350, %v420
    %v422 = vpop.f32.mrb[0].mxu0
    %v423 = vadd.f32 %v350, %v422
    %424 = vdwg.mxu0
    %v427 = vcombine.low %v421, %v423
    %v429 = vunpack.c.l.s4 1966171168
    %v430 = vunpack.c.0.s8 %v429
    %v431 = vlaneseq
    %v432 = vshrl.u32 %v431, 7
    %v433 = vsub.s32 %v430, %v432
    %v434 = vrot.slane %v427, %v433
    %v436 = vunpack.c.l.s4 1966171168
    %v437 = vunpack.c.0.s8 %v436
    %v438 = vlaneseq
    %v439 = vshrl.u32 %v438, 7
    %v440 = vsub.s32 %v437, %v439
    %v441 = vrot.slane %v434, %v440
    %v443 = vlaneseq
    %vm444 = vcmp.ge.s32.totalorder %v443, 0
    %vm445 = vcmp.lt.s32.totalorder %v443, 256
    %vm446 = vmand %vm444, %vm445
    %447 = vst.msk [vmem:[#allocation8] sm:$0x3] %vm446, %v441
    // Predicated region
    $region38: #{tpu_custom_call.1} parent=1 // pred_check
      _
    $region39: #{tpu_custom_call.1} parent=1 // pred_check_branch
      %449 = sbr.rel (0) target = $region41
    $region40: #{tpu_custom_call.1} parent=1 // pred_region
      %s451 = ssub.s32 32, 32
      %452 = vsyncadd [#allocation5], %s451
      %s454 = sshll.u32 [#allocation8], 4
      %s455 = int_to_ptr.vmem [resolvable:$true] %s454
      %457 = dma.vmem_to_hbm [thread:$0]  %s455, 32, %s7, [#allocation5]
    $region41: #{tpu_custom_call.1} parent=1 // pred_fallthru
      _
    // Predicated region
    $region42: #{tpu_custom_call.1} parent=1 // pred_check
      _
    $region43: #{tpu_custom_call.1} parent=1 // pred_check_branch
      %459 = sbr.rel (0) target = $region45
    $region44: #{tpu_custom_call.1} parent=1 // pred_region
      %460 = dma.done [#allocation5], 32
    $region45: #{tpu_custom_call.1} parent=1 // pred_fallthru
      _
    %461 = vsyncpa [#allocation4], 1
    %462 = vsyncpa [#allocation7], 1
    %463 = vsyncpa [#allocation5], 1

// kernel: tpu_custom_call.1
$region0: #{tpu_custom_call.1}
  #allocation0 [shape = 'u32[]', space=smem, size = 0x4, offset = 0x4, fixed_abs, tag = 'smem constant byte address 0x4 - core index']
  #allocation1 [shape = 'u32[144,128]{1,0:T(1,128)}', space=vmem, size = 0x12000, scoped, tag = 'internal scratch']
  #allocation2 [shape = 'f32[1,1]{1,0:T(1,128)S(1)}', space=vmem, size = 0x200, scoped, tag = 'scoped memory for tpu_custom_call.1']
  %s0 = inlined_call_operand.vmem [shape: f32[32,256], index: 0, kind: input, shape index: {}]
  %s1 = inlined_call_operand.hbm [shape: f32[32,32], index: 1, kind: input, shape index: {}]
  %s2 = inlined_call_operand.vmem [shape: f32[32,1], index: 2, kind: input, shape index: {}]
  %s3 = inlined_call_operand.hbm [shape: f32[32,32], index: 3, kind: input, shape index: {}]
  %s4 = inlined_call_operand.vmem [shape: f32[32,1], index: 4, kind: input, shape index: {}]
  %s5 = inlined_call_operand.vmem [shape: f32[1,32], index: 5, kind: input, shape index: {}]
  %s6 = inlined_call_operand.<no memory space> [shape: f32[1,1], index: 6, kind: input, shape index: {}]
  %s7 = inlined_call_operand.hbm [shape: f32[1,256], index: 7, kind: output, shape index: {}]
  %s8 = sld [smem:[#allocation0]]
  $region46: #{tpu_custom_call.1} parent=0
    _
  %s10 = ssub.s32 1, %s8
  %s11 = scalar_select 0, %s10, %s8
  %v12 = vstv %s6
  %13 = vst [vmem:[#allocation2] sm:$0x1] %v12
  $region1: #{tpu_custom_call.1} parent=0
    #allocation3 [shape = 'u8[16384]{0}', space=vmem, size = 0x4000, scoped, tag = 'input window, operand 1, single buffered']
    #allocation4 [shape = 's32[1]{0}', space=sflag, size = 0x4, scoped, tag = 'scoped memory for tpu_custom_call.1']
    #allocation5 [shape = 's32[1]{0}', space=sflag, size = 0x4, scoped, tag = 'scoped memory for tpu_custom_call.1']
    #allocation6 [shape = 'u8[16384]{0}', space=vmem, size = 0x4000, scoped, tag = 'input window, operand 3, single buffered']
    #allocation7 [shape = 's32[1]{0}', space=sflag, size = 0x4, scoped, tag = 'scoped memory for tpu_custom_call.1']
    #allocation8 [shape = 'u8[1024]{0}', space=vmem, size = 0x400, scoped, tag = 'output window, operand 0, single buffered']
    %14 = vsyncpa [#allocation4], 0
    %15 = vsyncpa [#allocation7], 0
    %16 = vsyncpa [#allocation5], 0
    // Predicated region
    $region2: #{tpu_custom_call.1} parent=1 // pred_check
      _
    $region3: #{tpu_custom_call.1} parent=1 // pred_check_branch
      %18 = sbr.rel (0) target = $region5
    $region4: #{tpu_custom_call.1} parent=1 // pred_region
      _
    $region5: #{tpu_custom_call.1} parent=1 // pred_fallthru
      _
    // Predicated region
    $region6: #{tpu_custom_call.1} parent=1 // pred_check
      _
    $region7: #{tpu_custom_call.1} parent=1 // pred_check_branch
      %20 = sbr.rel (0) target = $region9
    $region8: #{tpu_custom_call.1} parent=1 // pred_region
      %s22 = ssub.s32 512, 512
      %23 = vsyncadd [#allocation4], %s22
      %s24 = sshll.u32 [#allocation3], 4
      %s25 = int_to_ptr.vmem [resolvable:$true] %s24
      %30 = dma.hbm_to_vmem [thread:$0]  %s1, 512, %s25, [#allocation4], 128, 128, 8
    $region9: #{tpu_custom_call.1} parent=1 // pred_fallthru
      _
    // Predicated region
    $region10: #{tpu_custom_call.1} parent=1 // pred_check
      _
    $region11: #{tpu_custom_call.1} parent=1 // pred_check_branch
      %32 = sbr.rel (0) target = $region13
    $region12: #{tpu_custom_call.1} parent=1 // pred_region
      _
    $region13: #{tpu_custom_call.1} parent=1 // pred_fallthru
      _
    // Predicated region
    $region14: #{tpu_custom_call.1} parent=1 // pred_check
      _
    $region15: #{tpu_custom_call.1} parent=1 // pred_check_branch
      %34 = sbr.rel (0) target = $region17
    $region16: #{tpu_custom_call.1} parent=1 // pred_region
      %s36 = ssub.s32 512, 512
      %37 = vsyncadd [#allocation7], %s36
      %s38 = sshll.u32 [#allocation6], 4
      %s39 = int_to_ptr.vmem [resolvable:$true] %s38
      %44 = dma.hbm_to_vmem [thread:$0]  %s3, 512, %s39, [#allocation7], 128, 128, 8
    $region17: #{tpu_custom_call.1} parent=1 // pred_fallthru
      _
    // Predicated region
    $region18: #{tpu_custom_call.1} parent=1 // pred_check
      _
    $region19: #{tpu_custom_call.1} parent=1 // pred_check_branch
      %46 = sbr.rel (0) target = $region21
    $region20: #{tpu_custom_call.1} parent=1 // pred_region
      _
    $region21: #{tpu_custom_call.1} parent=1 // pred_fallthru
      _
    // Predicated region
    $region22: #{tpu_custom_call.1} parent=1 // pred_check
      _
    $region23: #{tpu_custom_call.1} parent=1 // pred_check_branch
      %48 = sbr.rel (0) target = $region25
    $region24: #{tpu_custom_call.1} parent=1 // pred_region
      _
    $region25: #{tpu_custom_call.1} parent=1 // pred_fallthru
      _
    // Predicated region
    $region26: #{tpu_custom_call.1} parent=1 // pred_check
      _
    $region27: #{tpu_custom_call.1} parent=1 // pred_check_branch
      %50 = sbr.rel (0) target = $region29
    $region28: #{tpu_custom_call.1} parent=1 // pred_region
      _
    $region29: #{tpu_custom_call.1} parent=1 // pred_fallthru
      _
    // Predicated region
    $region30: #{tpu_custom_call.1} parent=1 // pred_check
      _
    $region31: #{tpu_custom_call.1} parent=1 // pred_check_branch
      %52 = sbr.rel (0) target = $region33
    $region32: #{tpu_custom_call.1} parent=1 // pred_region
      %53 = dma.done [#allocation4], 512
    $region33: #{tpu_custom_call.1} parent=1 // pred_fallthru
      _
    // Predicated region
    $region34: #{tpu_custom_call.1} parent=1 // pred_check
      _
    $region35: #{tpu_custom_call.1} parent=1 // pred_check_branch
      %55 = sbr.rel (0) target = $region37
    $region36: #{tpu_custom_call.1} parent=1 // pred_region
      %56 = dma.done [#allocation7], 512
    $region37: #{tpu_custom_call.1} parent=1 // pred_fallthru
      _
    %v57 = vld [vmem:[#allocation3] sm:$0xff]
    %v58 = vld [vmem:[#allocation3 + $0x8] sm:$0xff]
    %v59 = vld [vmem:[#allocation3 + $0x10] sm:$0xff]
    %v60 = vld [vmem:[#allocation3 + $0x18] sm:$0xff]
    %v61 = vld [vmem:[%s0] sm:$0xff]
    %v62 = vld [vmem:[%s0 + $0x8] sm:$0xff]
    %v63 = vld [vmem:[%s0 + $0x10] sm:$0xff]
    %v64 = vld [vmem:[%s0 + $0x18] sm:$0xff]
    %v65 = vld [vmem:[%s0 + $0x20] sm:$0xff]
    %v66 = vld [vmem:[%s0 + $0x28] sm:$0xff]
    %v67 = vld [vmem:[%s0 + $0x30] sm:$0xff]
    %v68 = vld [vmem:[%s0 + $0x38] sm:$0xff]
    %v69 = vld [vmem:[%s2] sm:$0xff]
    %v70 = vld [vmem:[%s2 + $0x8] sm:$0xff]
    %v71 = vld [vmem:[%s2 + $0x10] sm:$0xff]
    %v72 = vld [vmem:[%s2 + $0x18] sm:$0xff]
    %74 = vset.pattern.permute.xlu0 0
    %75 = vperm.xlu0 %74, %v69
    %v76 = vpop.permute.xlu0 %75
    %79 = vset.pattern.permute.xlu0 0
    %80 = vperm.xlu0 %79, %v70
    %v81 = vpop.permute.xlu0 %80
    %84 = vset.pattern.permute.xlu0 0
    %85 = vperm.xlu0 %84, %v71
    %v86 = vpop.permute.xlu0 %85
    %89 = vset.pattern.permute.xlu0 0
    %90 = vperm.xlu0 %89, %v72
    %v91 = vpop.permute.xlu0 %90
    %vm93 = vcmask 261120
    %v95 = vsel %vm93, %v57, 0
    %v98 = vsel %vm93, %v58, 0
    %v101 = vsel %vm93, %v59, 0
    %v104 = vsel %vm93, %v60, 0
    %106 = vmatprep.subr.mxu0 %v62
    %107 = vmatpush1.msra.mxu0 %v61
    %108 = vmatprep.subr.mxu0 %v64
    %109 = vmatpush1.msra.mxu0 %v63
    %110 = vmatprep.subr.mxu0 %v66
    %111 = vmatpush1.msra.mxu0 %v65
    %112 = vmatprep.subr.mxu0 %v68
    %113 = vmatpush1.msra.mxu0 %v67
    %114 = vmatprep.subr.mxu0 0.0
    %115 = vmatpush1.msra.mxu0 0.0
    %116 = vmatprep.subr.mxu0 0.0
    %117 = vmatpush1.msra.mxu0 0.0
    %118 = vmatprep.subr.mxu0 0.0
    %119 = vmatpush1.msra.mxu0 0.0
    %120 = vmatprep.subr.mxu0 0.0
    %121 = vmatpush1.msra.mxu0 0.0
    %122 = vmatprep.subr.mxu0 0.0
    %123 = vmatpush1.msra.mxu0 0.0
    %124 = vmatprep.subr.mxu0 0.0
    %125 = vmatpush1.msra.mxu0 0.0
    %126 = vmatprep.subr.mxu0 0.0
    %127 = vmatpush1.msra.mxu0 0.0
    %128 = vmatprep.subr.mxu0 0.0
    %129 = vmatpush1.msra.mxu0 0.0
    %130 = vmatprep.subr.mxu0 0.0
    %131 = vmatpush1.msra.mxu0 0.0
    %132 = vmatprep.subr.mxu0 0.0
    %133 = vmatpush1.msra.mxu0 0.0
    %134 = vmatprep.subr.mxu0 0.0
    %135 = vmatpush1.msra.mxu0 0.0
    %136 = vmatprep.subr.mxu0 0.0
    %137 = vmatpush1.msra.mxu0 0.0
    %138 = vmatprep.subr.mxu0 0.0
    %139 = vmatpush1.msra.mxu0 0.0
    %140 = vmatprep.subr.mxu0 0.0
    %141 = vmatpush1.msra.mxu0 0.0
    %142 = vmatprep.subr.mxu0 0.0
    %143 = vmatpush1.msra.mxu0 0.0
    %144 = vmatprep.subr.mxu0 0.0
    %145 = vmatpush1.msra.mxu0 0.0
    %146 = vmatprep.subr.mxu0 0.0
    %147 = vmatpush1.msra.mxu0 0.0
    %148 = vmatprep.subr.mxu0 0.0
    %149 = vmatpush1.msra.mxu0 0.0
    %150 = vmatprep.subr.mxu0 0.0
    %151 = vmatpush1.msra.mxu0 0.0
    %152 = vmatprep.subr.mxu0 0.0
    %153 = vmatpush1.msra.mxu0 0.0
    %154 = vmatprep.subr.mxu0 0.0
    %155 = vmatpush1.msra.mxu0 0.0
    %156 = vmatprep.subr.mxu0 0.0
    %157 = vmatpush1.msra.mxu0 0.0
    %158 = vmatprep.subr.mxu0 0.0
    %159 = vmatpush1.msra.mxu0 0.0
    %160 = vmatprep.subr.mxu0 0.0
    %161 = vmatpush1.msra.mxu0 0.0
    %162 = vmatprep.subr.mxu0 0.0
    %163 = vmatpush1.msra.mxu0 0.0
    %164 = vmatprep.subr.mxu0 0.0
    %165 = vmatpush1.msra.mxu0 0.0
    %166 = vmatprep.subr.mxu0 0.0
    %167 = vmatpush1.msra.mxu0 0.0
    %168 = vmatprep.subr.mxu0 0.0
    %169 = vmatpush1.msra.mxu0 0.0
    %170 = vmatprep.mubr.f32.mxu0 0.0
    %171 = vmatmul.mubr.f32.gmra.mrb[0].mxu0 %v95
    %v172 = vpop.f32.mrb[0].mxu0
    %v173 = vadd.f32 %v76, %v172
    %v174 = vpop.f32.mrb[0].mxu0
    %v175 = vadd.f32 %v76, %v174
    %176 = vmatprep.mubr.f32.mxu0 0.0
    %177 = vmatmul.mubr.f32.gmra.mrb[0].mxu0 %v98
    %v178 = vpop.f32.mrb[0].mxu0
    %v179 = vadd.f32 %v81, %v178
    %v180 = vpop.f32.mrb[0].mxu0
    %v181 = vadd.f32 %v81, %v180
    %182 = vmatprep.mubr.f32.mxu0 0.0
    %183 = vmatmul.mubr.f32.gmra.mrb[0].mxu0 %v101
    %v184 = vpop.f32.mrb[0].mxu0
    %v185 = vadd.f32 %v86, %v184
    %v186 = vpop.f32.mrb[0].mxu0
    %v187 = vadd.f32 %v86, %v186
    %188 = vmatprep.mubr.f32.mxu0 0.0
    %189 = vmatmul.mubr.f32.gmra.mrb[0].mxu0 %v104
    %v190 = vpop.f32.mrb[0].mxu0
    %v191 = vadd.f32 %v91, %v190
    %v192 = vpop.f32.mrb[0].mxu0
    %v193 = vadd.f32 %v91, %v192
    %194 = vdwg.mxu0
    %v195 = vmax.f32 %v173, 0.0
    %v196 = vmax.f32 %v175, 0.0
    %v197 = vmax.f32 %v179, 0.0
    %v198 = vmax.f32 %v181, 0.0
    %v199 = vmax.f32 %v185, 0.0
    %v200 = vmax.f32 %v187, 0.0
    %v201 = vmax.f32 %v191, 0.0
    %v202 = vmax.f32 %v193, 0.0
    %v203 = vld [vmem:[#allocation6] sm:$0xff]
    %v204 = vld [vmem:[#allocation6 + $0x8] sm:$0xff]
    %v205 = vld [vmem:[#allocation6 + $0x10] sm:$0xff]
    %v206 = vld [vmem:[#allocation6 + $0x18] sm:$0xff]
    %v207 = vld [vmem:[%s4] sm:$0xff]
    %v208 = vld [vmem:[%s4 + $0x8] sm:$0xff]
    %v209 = vld [vmem:[%s4 + $0x10] sm:$0xff]
    %v210 = vld [vmem:[%s4 + $0x18] sm:$0xff]
    %212 = vset.pattern.permute.xlu0 0
    %213 = vperm.xlu0 %212, %v207
    %v214 = vpop.permute.xlu0 %213
    %217 = vset.pattern.permute.xlu0 0
    %218 = vperm.xlu0 %217, %v208
    %v219 = vpop.permute.xlu0 %218
    %222 = vset.pattern.permute.xlu0 0
    %223 = vperm.xlu0 %222, %v209
    %v224 = vpop.permute.xlu0 %223
    %227 = vset.pattern.permute.xlu0 0
    %228 = vperm.xlu0 %227, %v210
    %v229 = vpop.permute.xlu0 %228
    %v232 = vsel %vm93, %v203, 0
    %v235 = vsel %vm93, %v204, 0
    %v238 = vsel %vm93, %v205, 0
    %v241 = vsel %vm93, %v206, 0
    %243 = vmatprep.subr.mxu0 %v196
    %244 = vmatpush1.msra.mxu0 %v195
    %245 = vmatprep.subr.mxu0 %v198
    %246 = vmatpush1.msra.mxu0 %v197
    %247 = vmatprep.subr.mxu0 %v200
    %248 = vmatpush1.msra.mxu0 %v199
    %249 = vmatprep.subr.mxu0 %v202
    %250 = vmatpush1.msra.mxu0 %v201
    %251 = vmatprep.subr.mxu0 0.0
    %252 = vmatpush1.msra.mxu0 0.0
    %253 = vmatprep.subr.mxu0 0.0
    %254 = vmatpush1.msra.mxu0 0.0
    %255 = vmatprep.subr.mxu0 0.0
    %256 = vmatpush1.msra.mxu0 0.0
    %257 = vmatprep.subr.mxu0 0.0
    %258 = vmatpush1.msra.mxu0 0.0
    %259 = vmatprep.subr.mxu0 0.0
    %260 = vmatpush1.msra.mxu0 0.0
    %261 = vmatprep.subr.mxu0 0.0
    %262 = vmatpush1.msra.mxu0 0.0
    %263 = vmatprep.subr.mxu0 0.0
    %264 = vmatpush1.msra.mxu0 0.0
    %265 = vmatprep.subr.mxu0 0.0
    %266 = vmatpush1.msra.mxu0 0.0
    %267 = vmatprep.subr.mxu0 0.0
    %268 = vmatpush1.msra.mxu0 0.0
    %269 = vmatprep.subr.mxu0 0.0
    %270 = vmatpush1.msra.mxu0 0.0
    %271 = vmatprep.subr.mxu0 0.0
    %272 = vmatpush1.msra.mxu0 0.0
    %273 = vmatprep.subr.mxu0 0.0
    %274 = vmatpush1.msra.mxu0 0.0
    %275 = vmatprep.subr.mxu0 0.0
    %276 = vmatpush1.msra.mxu0 0.0
    %277 = vmatprep.subr.mxu0 0.0
    %278 = vmatpush1.msra.mxu0 0.0
    %279 = vmatprep.subr.mxu0 0.0
    %280 = vmatpush1.msra.mxu0 0.0
    %281 = vmatprep.subr.mxu0 0.0
    %282 = vmatpush1.msra.mxu0 0.0
    %283 = vmatprep.subr.mxu0 0.0
    %284 = vmatpush1.msra.mxu0 0.0
    %285 = vmatprep.subr.mxu0 0.0
    %286 = vmatpush1.msra.mxu0 0.0
    %287 = vmatprep.subr.mxu0 0.0
    %288 = vmatpush1.msra.mxu0 0.0
    %289 = vmatprep.subr.mxu0 0.0
    %290 = vmatpush1.msra.mxu0 0.0
    %291 = vmatprep.subr.mxu0 0.0
    %292 = vmatpush1.msra.mxu0 0.0
    %293 = vmatprep.subr.mxu0 0.0
    %294 = vmatpush1.msra.mxu0 0.0
    %295 = vmatprep.subr.mxu0 0.0
    %296 = vmatpush1.msra.mxu0 0.0
    %297 = vmatprep.subr.mxu0 0.0
    %298 = vmatpush1.msra.mxu0 0.0
    %299 = vmatprep.subr.mxu0 0.0
    %300 = vmatpush1.msra.mxu0 0.0
    %301 = vmatprep.subr.mxu0 0.0
    %302 = vmatpush1.msra.mxu0 0.0
    %303 = vmatprep.subr.mxu0 0.0
    %304 = vmatpush1.msra.mxu0 0.0
    %305 = vmatprep.subr.mxu0 0.0
    %306 = vmatpush1.msra.mxu0 0.0
    %307 = vmatprep.mubr.f32.mxu0 0.0
    %308 = vmatmul.mubr.f32.gmra.mrb[0].mxu0 %v232
    %v309 = vpop.f32.mrb[0].mxu0
    %v310 = vadd.f32 %v214, %v309
    %v311 = vpop.f32.mrb[0].mxu0
    %v312 = vadd.f32 %v214, %v311
    %313 = vmatprep.mubr.f32.mxu0 0.0
    %314 = vmatmul.mubr.f32.gmra.mrb[0].mxu0 %v235
    %v315 = vpop.f32.mrb[0].mxu0
    %v316 = vadd.f32 %v219, %v315
    %v317 = vpop.f32.mrb[0].mxu0
    %v318 = vadd.f32 %v219, %v317
    %319 = vmatprep.mubr.f32.mxu0 0.0
    %320 = vmatmul.mubr.f32.gmra.mrb[0].mxu0 %v238
    %v321 = vpop.f32.mrb[0].mxu0
    %v322 = vadd.f32 %v224, %v321
    %v323 = vpop.f32.mrb[0].mxu0
    %v324 = vadd.f32 %v224, %v323
    %325 = vmatprep.mubr.f32.mxu0 0.0
    %326 = vmatmul.mubr.f32.gmra.mrb[0].mxu0 %v241
    %v327 = vpop.f32.mrb[0].mxu0
    %v328 = vadd.f32 %v229, %v327
    %v329 = vpop.f32.mrb[0].mxu0
    %v330 = vadd.f32 %v229, %v329
    %331 = vdwg.mxu0
    %v332 = vmax.f32 %v310, 0.0
    %v333 = vmax.f32 %v312, 0.0
    %v334 = vmax.f32 %v316, 0.0
    %v335 = vmax.f32 %v318, 0.0
    %v336 = vmax.f32 %v322, 0.0
    %v337 = vmax.f32 %v324, 0.0
    %v338 = vmax.f32 %v328, 0.0
    %v339 = vmax.f32 %v330, 0.0
    %v340 = vld [vmem:[%s5] sm:$0x1]
    %v341 = vld [vmem:[#allocation2] sm:$0x1]
    %343 = vset.pattern.permute.xlu0 0
    %344 = vperm.xlu0 %343, %v341
    %v345 = vpop.permute.xlu0 %344
    %v347 = vlaneseq
    %v348 = vshrl.u32 %v347, 7
    %v349 = vsub.s32 0, %v348
    %v350 = vrot.slane %v345, %v349
    %v352 = vsel %vm93, %v340, 0
    %354 = vmatprep.subr.mxu0 %v333
    %355 = vmatpush1.msra.mxu0 %v332
    %356 = vmatprep.subr.mxu0 %v335
    %357 = vmatpush1.msra.mxu0 %v334
    %358 = vmatprep.subr.mxu0 %v337
    %359 = vmatpush1.msra.mxu0 %v336
    %360 = vmatprep.subr.mxu0 %v339
    %361 = vmatpush1.msra.mxu0 %v338
    %362 = vmatprep.subr.mxu0 0.0
    %363 = vmatpush1.msra.mxu0 0.0
    %364 = vmatprep.subr.mxu0 0.0
    %365 = vmatpush1.msra.mxu0 0.0
    %366 = vmatprep.subr.mxu0 0.0
    %367 = vmatpush1.msra.mxu0 0.0
    %368 = vmatprep.subr.mxu0 0.0
    %369 = vmatpush1.msra.mxu0 0.0
    %370 = vmatprep.subr.mxu0 0.0
    %371 = vmatpush1.msra.mxu0 0.0
    %372 = vmatprep.subr.mxu0 0.0
    %373 = vmatpush1.msra.mxu0 0.0
    %374 = vmatprep.subr.mxu0 0.0
    %375 = vmatpush1.msra.mxu0 0.0
    %376 = vmatprep.subr.mxu0 0.0
    %377 = vmatpush1.msra.mxu0 0.0
    %378 = vmatprep.subr.mxu0 0.0
    %379 = vmatpush1.msra.mxu0 0.0
    %380 = vmatprep.subr.mxu0 0.0
    %381 = vmatpush1.msra.mxu0 0.0
    %382 = vmatprep.subr.mxu0 0.0
    %383 = vmatpush1.msra.mxu0 0.0
    %384 = vmatprep.subr.mxu0 0.0
    %385 = vmatpush1.msra.mxu0 0.0
    %386 = vmatprep.subr.mxu0 0.0
    %387 = vmatpush1.msra.mxu0 0.0
    %388 = vmatprep.subr.mxu0 0.0
    %389 = vmatpush1.msra.mxu0 0.0
    %390 = vmatprep.subr.mxu0 0.0
    %391 = vmatpush1.msra.mxu0 0.0
    %392 = vmatprep.subr.mxu0 0.0
    %393 = vmatpush1.msra.mxu0 0.0
    %394 = vmatprep.subr.mxu0 0.0
    %395 = vmatpush1.msra.mxu0 0.0
    %396 = vmatprep.subr.mxu0 0.0
    %397 = vmatpush1.msra.mxu0 0.0
    %398 = vmatprep.subr.mxu0 0.0
    %399 = vmatpush1.msra.mxu0 0.0
    %400 = vmatprep.subr.mxu0 0.0
    %401 = vmatpush1.msra.mxu0 0.0
    %402 = vmatprep.subr.mxu0 0.0
    %403 = vmatpush1.msra.mxu0 0.0
    %404 = vmatprep.subr.mxu0 0.0
    %405 = vmatpush1.msra.mxu0 0.0
    %406 = vmatprep.subr.mxu0 0.0
    %407 = vmatpush1.msra.mxu0 0.0
    %408 = vmatprep.subr.mxu0 0.0
    %409 = vmatpush1.msra.mxu0 0.0
    %410 = vmatprep.subr.mxu0 0.0
    %411 = vmatpush1.msra.mxu0 0.0
    %412 = vmatprep.subr.mxu0 0.0
    %413 = vmatpush1.msra.mxu0 0.0
    %414 = vmatprep.subr.mxu0 0.0
    %415 = vmatpush1.msra.mxu0 0.0
    %416 = vmatprep.subr.mxu0 0.0
    %417 = vmatpush1.msra.mxu0 0.0
    %418 = vmatprep.mubr.f32.mxu0 0.0
    %419 = vmatmul.mubr.f32.gmra.mrb[0].mxu0 %v352
    %v420 = vpop.f32.mrb[0].mxu0
    %v421 = vadd.f32 %v350, %v420
    %v422 = vpop.f32.mrb[0].mxu0
    %v423 = vadd.f32 %v350, %v422
    %424 = vdwg.mxu0
    %v427 = vcombine.low %v421, %v423
    %v429 = vunpack.c.l.s4 1966171168
    %v430 = vunpack.c.0.s8 %v429
    %v431 = vlaneseq
    %v432 = vshrl.u32 %v431, 7
    %v433 = vsub.s32 %v430, %v432
    %v434 = vrot.slane %v427, %v433
    %v436 = vunpack.c.l.s4 1966171168
    %v437 = vunpack.c.0.s8 %v436
    %v438 = vlaneseq
    %v439 = vshrl.u32 %v438, 7
    %v440 = vsub.s32 %v437, %v439
    %v441 = vrot.slane %v434, %v440
    %v443 = vlaneseq
    %vm444 = vcmp.ge.s32.totalorder %v443, 0
    %vm445 = vcmp.lt.s32.totalorder %v443, 256
    %vm446 = vmand %vm444, %vm445
    %447 = vst.msk [vmem:[#allocation8] sm:$0x3] %vm446, %v441
    // Predicated region
    $region38: #{tpu_custom_call.1} parent=1 // pred_check
      _
    $region39: #{tpu_custom_call.1} parent=1 // pred_check_branch
      %449 = sbr.rel (0) target = $region41
    $region40: #{tpu_custom_call.1} parent=1 // pred_region
      %s451 = ssub.s32 32, 32
      %452 = vsyncadd [#allocation5], %s451
      %s454 = sshll.u32 [#allocation8], 4
      %s455 = int_to_ptr.vmem [resolvable:$true] %s454
      %457 = dma.vmem_to_hbm [thread:$0]  %s455, 32, %s7, [#allocation5]
    $region41: #{tpu_custom_call.1} parent=1 // pred_fallthru
      _
    // Predicated region
    $region42: #{tpu_custom_call.1} parent=1 // pred_check
      _
    $region43: #{tpu_custom_call.1} parent=1 // pred_check_branch
      %459 = sbr.rel (0) target = $region45
    $region44: #{tpu_custom_call.1} parent=1 // pred_region
      %460 = dma.done [#allocation5], 32
    $region45: #{tpu_custom_call.1} parent=1 // pred_fallthru
      _
    %461 = vsyncpa [#allocation4], 1
    %462 = vsyncpa [#allocation7], 1
    %463 = vsyncpa [#allocation5], 1

</llo_original>
